<compile_context>
chip_gen: v5e
topology: v5e:2x2
jax: 0.10.0
libtpu: 0.0.40
codegen_flags: <defaults>
</compile_context>

<pallas_src>
import jax
import jax.numpy as jnp
from jax.experimental import pallas as pl
from jax.experimental.pallas import tpu as pltpu


_SMEM = pl.BlockSpec(memory_space=pltpu.MemorySpace.SMEM)
_VMEM_LIMIT = 64 * 1024 * 1024
_LANE_1D = 1024


# --------------------------------------------------------------------------
# Tiling helpers (all shapes are static at trace time)
# --------------------------------------------------------------------------
def _row_tile(m):
    """Row tile for dim==2: >= 2 grid steps whenever m > 16 (megacore split)."""
    if m <= 16:
        return m
    for t in (512, 256, 128, 64, 32, 16, 8):
        if t <= m // 2 and m % t == 0:
            return t
    return m            # awkward m: single full-row step (still correct)


def _col_tile(n):
    """Column tile for dim==2 (lane-dense multiples of 128 when possible)."""
    if n <= 256:
        return n
    for t in (512, 256, 128):
        if n % t == 0:
            return t
    return n


def _out_tile_4d(n_out):
    """n_out tile for dim==4: >= 2 parallel steps for n_out >= 256, which also
    bounds the VMEM-resident (n_f, n_in, tile) accumulator (v7x 64 MiB)."""
    if n_out < 256:
        return n_out
    for t in (256, 128):
        if n_out % t == 0:
            return t
    return n_out


def _rows_1d(n):
    rows = -(-n // _LANE_1D)
    tr = rows if rows <= 256 else 256
    rows_pad = -(-rows // tr) * tr
    return rows_pad, tr


def _pad_1d(v, rows_pad):
    n = v.shape[0]
    return jnp.pad(v, (0, rows_pad * _LANE_1D - n)).reshape(rows_pad, _LANE_1D)


# --------------------------------------------------------------------------
# Pallas kernels
# --------------------------------------------------------------------------
def _mc1_kernel(lr_ref, mc_ref, g_ref, o_ref):
    # out = lr * mc * grad on a lane-dense (rows_tile, 1024) tile.
    o_ref[...] = lr_ref[0] * mc_ref[...] * g_ref[...]


def _mc2_kernel(lr_ref, mci_ref, g_ref, mco_ref, o_ref, u_ref):
    # out[i-rows, j-cols] = lr * (mc_in[i-rows, :] @ grad) @ mc_out[:, j-cols]
    # The (tm, n) intermediate u is computed once per row tile (at j == 0) and
    # cached in VMEM scratch; column tiles only pay the second matmul.
    @pl.when(pl.program_id(1) == 0)
    def _():
        u_ref[...] = jnp.dot(mci_ref[...], g_ref[...],
                             preferred_element_type=jnp.float32)

    o_ref[...] = (lr_ref[0] * jnp.dot(u_ref[...], mco_ref[...],
                                      preferred_element_type=jnp.float32)
                  ).astype(o_ref.dtype)


def _mc4_kernel(lr_ref, mcf_ref, mci_ref, g_ref, mco_ref, o_ref):
    # Grid: (j over n_out tiles [parallel], f over spatial slabs [arbitrary]).
    f = pl.program_id(1)

    # Mode-1 / mode-2 products for spatial slab f on the MXU.  lr is folded in
    # here (the mc_f contraction below is linear, so the scale commutes).
    t = jnp.dot(mci_ref[...], g_ref[0], preferred_element_type=jnp.float32)
    t = jnp.dot(t, mco_ref[...], preferred_element_type=jnp.float32)
    o_ref[f] = lr_ref[0] * t          # stash slab f in the resident output block

    # Mode-3 (mc_f) product: ONE lane-dense MXU matmul over the stacked slabs,
    # performed in place on the VMEM-resident output block at the last f.
    @pl.when(f == pl.num_programs(1) - 1)
    def _finalize():
        n_f, n_in, tno = o_ref.shape
        stacked = o_ref[...].reshape(n_f, n_in * tno)
        mixed = jnp.dot(mcf_ref[...], stacked,
                        preferred_element_type=jnp.float32)
        o_ref[...] = mixed.reshape(n_f, n_in, tno)


# --------------------------------------------------------------------------
# Jitted wrappers
# --------------------------------------------------------------------------
@jax.jit
def mc_transform_1d(lr, mc2, grad):
    n = grad.shape[0]
    rows_pad, lane = mc2.shape
    tr = rows_pad if rows_pad <= 256 else 256
    g2 = _pad_1d(grad.astype(jnp.float32), rows_pad)
    out = pl.pallas_call(
        _mc1_kernel,
        out_shape=jax.ShapeDtypeStruct((rows_pad, lane), jnp.float32),
        grid=(rows_pad // tr,),
        in_specs=[_SMEM,
                  pl.BlockSpec((tr, lane), lambda i: (i, 0)),
                  pl.BlockSpec((tr, lane), lambda i: (i, 0))],
        out_specs=pl.BlockSpec((tr, lane), lambda i: (i, 0)),
        compiler_params=pltpu.CompilerParams(
            dimension_semantics=("parallel",)),
    )(lr, mc2, g2)
    return out.reshape(-1)[:n]


@jax.jit
def mc_transform_2d(lr, mc_in, grad, mc_out):
    m, n = grad.shape
    tm = _row_tile(m)
    tn = _col_tile(n)
    # NOTE: grad uses a constant-index full block; Pallas only DMAs it once
    # (block index never changes).  Single-buffering it would additionally
    # halve its VMEM footprint — left at default buffering for compatibility.
    # TODO(synk): for grads too large to keep resident in VMEM (>~8-16 MiB on
    # v7x) add a k-reduction grid axis over grad rows with an f32 accumulator.
    return pl.pallas_call(
        _mc2_kernel,
        out_shape=jax.ShapeDtypeStruct((m, n), jnp.float32),
        grid=(m // tm, n // tn),
        in_specs=[_SMEM,                                          # lr
                  pl.BlockSpec((tm, m), lambda i, j: (i, 0)),     # mc_in rows
                  pl.BlockSpec((m, n), lambda i, j: (0, 0)),      # grad (resident)
                  pl.BlockSpec((n, tn), lambda i, j: (0, j))],    # mc_out cols
        out_specs=pl.BlockSpec((tm, tn), lambda i, j: (i, j)),
        scratch_shapes=[pltpu.VMEM((tm, n), jnp.float32)],        # u = mci @ g
        compiler_params=pltpu.CompilerParams(
            dimension_semantics=("parallel", "arbitrary"),
            vmem_limit_bytes=_VMEM_LIMIT),
    )(lr, mc_in, grad, mc_out)


@jax.jit
def mc_transform_4d(lr, mc_in, mc_out, mc_f, grad):
    n_in, n_out, kh, kw = grad.shape
    n_f = kh * kw
    tno = _out_tile_4d(n_out)
    # Same layout "glue" as the PyTorch permute; the three mode products and
    # all intermediates are fused into a single kernel (grad read from HBM
    # once, output written once).
    # TODO(synk): the input/output permutes still run as XLA transposes in
    # HBM; absorbing them in-kernel would need a Mosaic-safe relayout of the
    # spatial axis.
    p = jnp.transpose(grad, (2, 3, 0, 1)).reshape(n_f, n_in, n_out)
    out3 = pl.pallas_call(
        _mc4_kernel,
        out_shape=jax.ShapeDtypeStruct((n_f, n_in, n_out), jnp.float32),
        grid=(n_out // tno, n_f),
        in_specs=[_SMEM,                                                   # lr
                  pl.BlockSpec((n_f, n_f), lambda j, f: (0, 0)),           # mc_f
                  pl.BlockSpec((n_in, n_in), lambda j, f: (0, 0)),         # mc_in
                  pl.BlockSpec((1, n_in, n_out), lambda j, f: (f, 0, 0)),  # grad slab
                  pl.BlockSpec((n_out, tno), lambda j, f: (0, j))],        # mc_out cols
        out_specs=pl.BlockSpec((n_f, n_in, tno), lambda j, f: (0, 0, j)),
        compiler_params=pltpu.CompilerParams(
            dimension_semantics=("parallel", "arbitrary"),
            vmem_limit_bytes=_VMEM_LIMIT),
    )(lr, mc_f, mc_in, p, mc_out)
    return jnp.transpose(out3, (1, 2, 0)).reshape(n_in, n_out, kh, kw)


# --------------------------------------------------------------------------
# Module (JAX/Pallas port of MetaCurvatureTransform)
# --------------------------------------------------------------------------
class MetaCurvatureTransform:
    def __init__(self, param_shape, lr=1.0, key=None):
        self.lr = float(lr)
        self.lr_arr = jnp.full((1,), self.lr, jnp.float32)
        shape = tuple(int(s) for s in param_shape)
        if key is None:
            key = jax.random.PRNGKey(0)

        if len(shape) == 1:
            self.dim = 1
            # __init__ uses ones_like; add a small deterministic perturbation
            # so the kernel path is actually exercised.
            self.mc = jnp.ones(shape, jnp.float32) + 0.05 * jax.random.normal(
                key, shape, jnp.float32)
            rows_pad, _ = _rows_1d(shape[0])
            # Padded/reshaped view of mc is static per module: precompute once.
            self._mc2 = _pad_1d(self.mc, rows_pad)
        elif len(shape) == 2:
            self.dim = 2
            k1, k2 = jax.random.split(key)
            self.mc_in = jnp.eye(shape[0], dtype=jnp.float32) + 0.05 * jax.random.normal(
                k1, (shape[0], shape[0]), jnp.float32)
            self.mc_out = jnp.eye(shape[1], dtype=jnp.float32) + 0.05 * jax.random.normal(
                k2, (shape[1], shape[1]), jnp.float32)
        elif len(shape) == 4:
            self.dim = 4
            self.n_in = shape[0]
            self.n_out = shape[1]
            self.n_f = shape[2] * shape[3]
            k1, k2, k3 = jax.random.split(key, 3)
            self.mc_in = jnp.eye(self.n_in, dtype=jnp.float32) + 0.05 * jax.random.normal(
                k1, (self.n_in, self.n_in), jnp.float32)
            self.mc_out = jnp.eye(self.n_out, dtype=jnp.float32) + 0.05 * jax.random.normal(
                k2, (self.n_out, self.n_out), jnp.float32)
            self.mc_f = jnp.eye(self.n_f, dtype=jnp.float32) + 0.05 * jax.random.normal(
                k3, (self.n_f, self.n_f), jnp.float32)
        else:
            raise NotImplementedError(
                "Parameter with shape", shape, "is not supported by MetaCurvature."
            )

    def __call__(self, grad):
        # TODO(synk): for many tiny parameters (n < 128) in a real meta-learner,
        # batch several tensors into one lane-dense pallas_call instead of one
        # launch per parameter (per-call overhead dominates at these sizes).
        grad = grad.astype(jnp.float32)
        if self.dim == 1:
            return mc_transform_1d(self.lr_arr, self._mc2, grad)
        elif self.dim == 2:
            return mc_transform_2d(self.lr_arr, self.mc_in, grad, self.mc_out)
        else:
            return mc_transform_4d(self.lr_arr, self.mc_in, self.mc_out, self.mc_f, grad)


# --------------------------------------------------------------------------
# Pure-JAX reference (mirrors the PyTorch forward exactly)
# --------------------------------------------------------------------------
def reference_forward(mod, grad):
    grad = grad.astype(jnp.float32)
    if mod.dim == 1:
        update = mod.mc * grad
    elif mod.dim == 2:
        update = mod.mc_in @ grad @ mod.mc_out
    else:
        n_in, n_out, n_f = mod.n_in, mod.n_out, mod.n_f
        update = jnp.transpose(grad, (2, 3, 0, 1))
        shape = update.shape
        update = update.reshape(-1, n_out) @ mod.mc_out
        update = mod.mc_f @ update.reshape(n_f, -1)
        update = update.reshape(n_f, n_in, n_out)
        update = jnp.transpose(update, (1, 0, 2)).reshape(n_in, -1)
        update = mod.mc_in @ update
        update = jnp.transpose(update.reshape(n_in, n_f, n_out), (1, 0, 2)).reshape(shape)
        update = jnp.transpose(update, (2, 3, 0, 1))
    return mod.lr * update


# --------------------------------------------------------------------------
if __name__ == "__main__":
    key = jax.random.PRNGKey(0)
    k_g1, k_g2, k_g4, k_p1, k_p2, k_p4 = jax.random.split(key, 6)

    lr = 0.5

    # dim = 1 (bias-like parameter)
    grad1 = jax.random.normal(k_g1, (64,), jnp.float32)
    mod1 = MetaCurvatureTransform((64,), lr=lr, key=k_p1)
    out1 = jax.block_until_ready(mod1(grad1))
    ref1 = reference_forward(mod1, grad1)

    # dim = 2 (linear-layer weight)
    grad2 = jax.random.normal(k_g2, (16, 32), jnp.float32)
    mod2 = MetaCurvatureTransform((16, 32), lr=lr, key=k_p2)
    out2 = jax.block_until_ready(mod2(grad2))
    ref2 = reference_forward(mod2, grad2)

    # dim = 4 (conv-layer weight, (n_in, n_out, kh, kw))
    grad4 = jax.random.normal(k_g4, (8, 16, 3, 3), jnp.float32)
    mod4 = MetaCurvatureTransform((8, 16, 3, 3), lr=lr, key=k_p4)
    out4 = jax.block_until_ready(mod4(grad4))
    ref4 = reference_forward(mod4, grad4)

    assert out1.shape == grad1.shape and out2.shape == grad2.shape and out4.shape == grad4.shape
    assert jnp.allclose(out1, ref1, rtol=1e-5, atol=1e-5)
    assert jnp.allclose(out2, ref2, rtol=1e-5, atol=1e-5)
    assert jnp.allclose(out4, ref4, rtol=1e-5, atol=1e-5)

    print("KERNEL_OK")
</pallas_src>

<mosaic_0001>
module attributes {stable_mosaic.version = 11 : i64} {
  func.func @_mc1_kernel(%arg0: i32, %arg1: memref<1xf32, #tpu.memory_space<smem>>, %arg2: memref<1x1024xf32, #tpu.memory_space<vmem>>, %arg3: memref<1x1024xf32, #tpu.memory_space<vmem>>, %arg4: memref<1x1024xf32, #tpu.memory_space<vmem>>) attributes {dimension_semantics = [#tpu.dimension_semantics<parallel>], iteration_bounds = array<i64: 1>, scalar_prefetch = 0 : i64, scratch_operands = 0 : i64, tpu.core_type = #tpu.core_type<tc>, window_params = [{transform_indices = @transform_0, window_bounds = array<i64: 1>}, {transform_indices = @transform_1, window_bounds = array<i64: 1, 1024>}, {transform_indices = @transform_2, window_bounds = array<i64: 1, 1024>}, {transform_indices = @transform_3, window_bounds = array<i64: 1, 1024>}]} {
    %c0 = arith.constant 0 : index
    %0 = memref.load %arg1[%c0] : memref<1xf32, #tpu.memory_space<smem>>
    %c0_0 = arith.constant 0 : index
    %c0_1 = arith.constant 0 : index
    %1 = vector.load %arg2[%c0_0, %c0_1] : memref<1x1024xf32, #tpu.memory_space<vmem>>, vector<1x1024xf32>
    %2 = vector.broadcast %0 : f32 to vector<1x1024xf32>
    %3 = arith.mulf %2, %1 : vector<1x1024xf32>
    %c0_2 = arith.constant 0 : index
    %c0_3 = arith.constant 0 : index
    %4 = vector.load %arg3[%c0_2, %c0_3] : memref<1x1024xf32, #tpu.memory_space<vmem>>, vector<1x1024xf32>
    %5 = arith.mulf %3, %4 : vector<1x1024xf32>
    %c0_4 = arith.constant 0 : index
    %c0_5 = arith.constant 0 : index
    %6 = vector.load %arg4[%c0_4, %c0_5] : memref<1x1024xf32, #tpu.memory_space<vmem>>, vector<1x1024xf32>
    tpu.vector_store %arg4[%c0_4, %c0_5], %5 {strides = array<i32>} : memref<1x1024xf32, #tpu.memory_space<vmem>>, vector<1x1024xf32>,
    return
  }
  func.func @transform_0(%arg0: i32) -> i32 {
    %c0_i32 = arith.constant 0 : i32
    %c0_i32_0 = arith.constant 0 : i32
    return %c0_i32 : i32
  }
  func.func @transform_1(%arg0: i32) -> (i32, i32) {
    %c0_i32 = arith.constant 0 : i32
    %c0_i32_0 = arith.constant 0 : i32
    return %arg0, %c0_i32 : i32, i32
  }
  func.func @transform_2(%arg0: i32) -> (i32, i32) {
    %c0_i32 = arith.constant 0 : i32
    %c0_i32_0 = arith.constant 0 : i32
    return %arg0, %c0_i32 : i32, i32
  }
  func.func @transform_3(%arg0: i32) -> (i32, i32) {
    %c0_i32 = arith.constant 0 : i32
    %c0_i32_0 = arith.constant 0 : i32
    return %arg0, %c0_i32 : i32, i32
  }
}

</mosaic_0001>

<llo_original>
// kernel: mc_transform_1d.1
$region0: #{mc_transform_1d.1}
  #allocation0 [shape = 'u32[]', space=smem, size = 0x4, offset = 0x4, fixed_abs, tag = 'smem constant byte address 0x4 - core index']
  #allocation1 [shape = 'u32[72,128]{1,0:T(1,128)}', space=vmem, size = 0x9000, scoped, tag = 'internal scratch']
  #allocation2 [shape = 'f32[1]{0:T(128)S(6)}', space=smem, size = 0x200, scoped, tag = 'scoped memory for mc_transform_1d.1']
  %s0 = inlined_call_operand.<no memory space> [shape: f32[1], index: 0, kind: input, shape index: {}]
  %s1 = inlined_call_operand.vmem [shape: f32[1,1024], index: 1, kind: input, shape index: {}]
  %s2 = inlined_call_operand.vmem [shape: f32[1,1024], index: 2, kind: input, shape index: {}]
  %s3 = inlined_call_operand.vmem [shape: f32[1,1024], index: 3, kind: output, shape index: {}]
  %s4 = sld [smem:[#allocation0]]
  $region22: #{mc_transform_1d.1} parent=0
    _
  %s6 = ssub.s32 1, %s4
  %s7 = scalar_select 0, %s6, %s4
  %8 = sst [smem:[#allocation2]] %s0
  // Predicated region
  $region2: #{mc_transform_1d.1} parent=0 // pred_check
    _
  $region3: #{mc_transform_1d.1} parent=0 // pred_check_branch
    %10 = sbr.rel (0) target = $region5
  $region4: #{mc_transform_1d.1} parent=0 // pred_region
    _
  $region5: #{mc_transform_1d.1} parent=0 // pred_fallthru
    _
  // Predicated region
  $region6: #{mc_transform_1d.1} parent=0 // pred_check
    _
  $region7: #{mc_transform_1d.1} parent=0 // pred_check_branch
    %12 = sbr.rel (0) target = $region9
  $region8: #{mc_transform_1d.1} parent=0 // pred_region
    _
  $region9: #{mc_transform_1d.1} parent=0 // pred_fallthru
    _
  // Predicated region
  $region10: #{mc_transform_1d.1} parent=0 // pred_check
    _
  $region11: #{mc_transform_1d.1} parent=0 // pred_check_branch
    %14 = sbr.rel (0) target = $region13
  $region12: #{mc_transform_1d.1} parent=0 // pred_region
    _
  $region13: #{mc_transform_1d.1} parent=0 // pred_fallthru
    _
  %s15 = sld [smem:[#allocation2]]
  %v16 = vld [vmem:[%s1] sm:$0xff]
  %v17 = vstv %s15
  %v18 = vmul.f32 %v17, %v16
  %v19 = vld [vmem:[%s2] sm:$0xff]
  %v20 = vmul.f32 %v18, %v19
  %21 = vst [vmem:[%s3] sm:$0xff] %v20
  // Predicated region
  $region14: #{mc_transform_1d.1} parent=0 // pred_check
    _
  $region15: #{mc_transform_1d.1} parent=0 // pred_check_branch
    %23 = sbr.rel (0) target = $region17
  $region16: #{mc_transform_1d.1} parent=0 // pred_region
    _
  $region17: #{mc_transform_1d.1} parent=0 // pred_fallthru
    _
  // Predicated region
  $region18: #{mc_transform_1d.1} parent=0 // pred_check
    _
  $region19: #{mc_transform_1d.1} parent=0 // pred_check_branch
    %25 = sbr.rel (0) target = $region21
  $region20: #{mc_transform_1d.1} parent=0 // pred_region
    _
  $region21: #{mc_transform_1d.1} parent=0 // pred_fallthru
    _

</llo_original>
